<compile_context>
chip_gen: v5e
topology: v5e:2x2
jax: 0.10.0
libtpu: 0.0.40
codegen_flags: <defaults>
</compile_context>

<pallas_src>
import jax
import jax.numpy as jnp
from jax.experimental import pallas as pl
from jax.experimental.pallas import tpu as pltpu


def _rescale_kernel(x_ref, mult_ref, bias_ref, o_ref):
    # x_ref:    (TR, C)  raw policy-net output tile (native dtype)
    # mult_ref: (1, C)   (high - low) / 2                      [f32, resident]
    # bias_ref: (1, C)   low + (high - low) / 2                [f32, resident]
    # o = (x + 1) * mult + low  ==  x * mult + bias
    x = x_ref[...].astype(jnp.float32)
    o_ref[...] = (x * mult_ref[...] + bias_ref[...]).astype(o_ref.dtype)


def _run_rescale(x2d, mult_row, bias_row, out_dtype):
    """x2d: (R, C); mult_row/bias_row: (1, C) f32. Returns (R, C) in out_dtype."""
    R, C = x2d.shape

    # Row-tile: full array if small, otherwise a large 8-aligned tile (512-2048 range
    # per measured tiled-add roofline data). Partial trailing blocks are handled by
    # Pallas (masked writes), so R need not divide evenly.
    TR = R if R <= 1024 else 1024

    return pl.pallas_call(
        _rescale_kernel,
        out_shape=jax.ShapeDtypeStruct((R, C), out_dtype),
        grid=(pl.cdiv(R, TR),),
        in_specs=[
            pl.BlockSpec((TR, C), lambda i: (i, 0)),
            pl.BlockSpec((1, C), lambda i: (0, 0)),   # constant -> stays resident
            pl.BlockSpec((1, C), lambda i: (0, 0)),   # constant -> stays resident
        ],
        out_specs=pl.BlockSpec((TR, C), lambda i: (i, 0)),
        compiler_params=pltpu.CompilerParams(
            dimension_semantics=("parallel",),
            vmem_limit_bytes=32 * 1024 * 1024,  # safe on v5e/v6e and v7x (64 MiB phys)
        ),
    )(x2d, mult_row, bias_row)


def continuous_policy_forward(x, action_low, action_high, out_dtype=None):
    """x: (B, A) — output of the (undefined) trunk network, any float dtype.
    Returns actions rescaled into [action_low, action_high] (dtype = x.dtype unless
    out_dtype is given)."""
    B, A = x.shape
    out_dtype = jnp.dtype(out_dtype) if out_dtype is not None else x.dtype

    low = action_low.astype(jnp.float32).reshape(1, A)
    high = action_high.astype(jnp.float32).reshape(1, A)
    mult = (high - low) * 0.5          # (1, A)
    bias = low + mult                  # (1, A)   (x+1)*mult + low == x*mult + bias

    # Lane-dense path: small A means masked partial stores; when the flat tensor tiles
    # into 128-wide lanes with a consistent action period, view it as (rows, 128).
    if A <= 128 and 128 % A == 0 and (B * A) % 128 == 0:
        reps = 128 // A
        x_view = x.reshape((B * A) // 128, 128)          # row-major: lane l -> action l % A
        mult_v = jnp.tile(mult, (1, reps))               # (1, 128)
        bias_v = jnp.tile(bias, (1, reps))               # (1, 128)
        out = _run_rescale(x_view, mult_v, bias_v, out_dtype)
        return out.reshape(B, A)

    # General path: lane axis = A (full array dim, so the (8,128) rule is satisfied).
    return _run_rescale(x, mult, bias, out_dtype)


if __name__ == "__main__":
    key = jax.random.PRNGKey(0)
    k1, k2 = jax.random.split(key)

    n_actions = 8
    action_low = jnp.linspace(-2.0, -1.0, n_actions, dtype=jnp.float32)
    action_high = jnp.linspace(1.0, 2.0, n_actions, dtype=jnp.float32)
    mult_ref = ((action_high - action_low) / 2.0)[None, :]
    low_ref = action_low[None, :]

    # --- check 1: tiny batch, f32, general (non-lane-dense) path ---
    batch = 2
    x = jax.random.uniform(k1, (batch, n_actions), jnp.float32, minval=-1.0, maxval=1.0)
    out = jax.block_until_ready(continuous_policy_forward(x, action_low, action_high))
    ref = (x + 1.0) * mult_ref + low_ref
    assert out.shape == (batch, n_actions)
    assert out.dtype == jnp.float32
    assert jnp.allclose(out, ref, atol=1e-5, rtol=1e-5)

    # --- check 2: bf16 input, batch sized so the lane-dense (rows, 128) path is used ---
    batch2 = 64   # 64 * 8 = 512 elements -> (4, 128) view
    x2 = jax.random.uniform(k2, (batch2, n_actions), jnp.float32,
                            minval=-1.0, maxval=1.0).astype(jnp.bfloat16)
    out2 = jax.block_until_ready(continuous_policy_forward(x2, action_low, action_high))
    ref2 = (x2.astype(jnp.float32) + 1.0) * mult_ref + low_ref
    assert out2.shape == (batch2, n_actions)
    assert out2.dtype == jnp.bfloat16
    assert jnp.allclose(out2.astype(jnp.float32), ref2, atol=2e-2, rtol=2e-2)

    print("KERNEL_OK")
</pallas_src>

<mosaic_0001>
module attributes {stable_mosaic.version = 11 : i64} {
  func.func @_rescale_kernel(%arg0: i32, %arg1: memref<2x8xf32, #tpu.memory_space<vmem>>, %arg2: memref<1x8xf32, #tpu.memory_space<vmem>>, %arg3: memref<1x8xf32, #tpu.memory_space<vmem>>, %arg4: memref<2x8xf32, #tpu.memory_space<vmem>>) attributes {dimension_semantics = [#tpu.dimension_semantics<parallel>], iteration_bounds = array<i64: 1>, scalar_prefetch = 0 : i64, scratch_operands = 0 : i64, tpu.core_type = #tpu.core_type<tc>, window_params = [{transform_indices = @transform_0, window_bounds = array<i64: 2, 8>}, {pipeline_mode = #tpu.pipeline_mode<synchronous>, transform_indices = @transform_1, window_bounds = array<i64: 1, 8>}, {pipeline_mode = #tpu.pipeline_mode<synchronous>, transform_indices = @transform_2, window_bounds = array<i64: 1, 8>}, {transform_indices = @transform_3, window_bounds = array<i64: 2, 8>}]} {
    %c0 = arith.constant 0 : index
    %c0_0 = arith.constant 0 : index
    %0 = vector.load %arg1[%c0, %c0_0] : memref<2x8xf32, #tpu.memory_space<vmem>>, vector<2x8xf32>
    %c0_1 = arith.constant 0 : index
    %c0_2 = arith.constant 0 : index
    %1 = vector.load %arg2[%c0_1, %c0_2] : memref<1x8xf32, #tpu.memory_space<vmem>>, vector<1x8xf32>
    %2 = vector.broadcast %1 : vector<1x8xf32> to vector<2x8xf32>
    %3 = arith.mulf %0, %2 : vector<2x8xf32>
    %c0_3 = arith.constant 0 : index
    %c0_4 = arith.constant 0 : index
    %4 = vector.load %arg3[%c0_3, %c0_4] : memref<1x8xf32, #tpu.memory_space<vmem>>, vector<1x8xf32>
    %5 = vector.broadcast %4 : vector<1x8xf32> to vector<2x8xf32>
    %6 = arith.addf %3, %5 : vector<2x8xf32>
    %c0_5 = arith.constant 0 : index
    %c0_6 = arith.constant 0 : index
    %7 = vector.load %arg4[%c0_5, %c0_6] : memref<2x8xf32, #tpu.memory_space<vmem>>, vector<2x8xf32>
    tpu.vector_store %arg4[%c0_5, %c0_6], %6 {strides = array<i32>} : memref<2x8xf32, #tpu.memory_space<vmem>>, vector<2x8xf32>,
    return
  }
  func.func @transform_0(%arg0: i32) -> (i32, i32) {
    %c0_i32 = arith.constant 0 : i32
    %c0_i32_0 = arith.constant 0 : i32
    return %arg0, %c0_i32 : i32, i32
  }
  func.func @transform_1(%arg0: i32) -> (i32, i32) {
    %c0_i32 = arith.constant 0 : i32
    %c0_i32_0 = arith.constant 0 : i32
    %c0_i32_1 = arith.constant 0 : i32
    return %c0_i32, %c0_i32_0 : i32, i32
  }
  func.func @transform_2(%arg0: i32) -> (i32, i32) {
    %c0_i32 = arith.constant 0 : i32
    %c0_i32_0 = arith.constant 0 : i32
    %c0_i32_1 = arith.constant 0 : i32
    return %c0_i32, %c0_i32_0 : i32, i32
  }
  func.func @transform_3(%arg0: i32) -> (i32, i32) {
    %c0_i32 = arith.constant 0 : i32
    %c0_i32_0 = arith.constant 0 : i32
    return %arg0, %c0_i32 : i32, i32
  }
}

</mosaic_0001>

<llo_original>
// kernel: tpu_custom_call.1
$region0: #{tpu_custom_call.1}
  #allocation0 [shape = 'u32[]', space=smem, size = 0x4, offset = 0x4, fixed_abs, tag = 'smem constant byte address 0x4 - core index']
  #allocation1 [shape = 'u32[72,128]{1,0:T(1,128)}', space=vmem, size = 0x9000, scoped, tag = 'internal scratch']
  %s0 = inlined_call_operand.hbm [shape: f32[2,8], index: 0, kind: input, shape index: {}]
  %s1 = inlined_call_operand.hbm [shape: f32[1,8], index: 1, kind: input, shape index: {}]
  %s2 = inlined_call_operand.vmem [shape: f32[1,8], index: 2, kind: input, shape index: {}]
  %s3 = inlined_call_operand.hbm [shape: f32[2,8], index: 3, kind: output, shape index: {}]
  %s4 = sld [smem:[#allocation0]]
  $region30: #{tpu_custom_call.1} parent=0
    _
  %s6 = ssub.s32 1, %s4
  %s7 = scalar_select 0, %s6, %s4
  $region1: #{tpu_custom_call.1} parent=0
    #allocation2 [shape = 'u8[1024]{0}', space=vmem, size = 0x400, scoped, tag = 'input window, operand 0, single buffered']
    #allocation3 [shape = 's32[1]{0}', space=sflag, size = 0x4, scoped, tag = 'scoped memory for tpu_custom_call.1']
    #allocation4 [shape = 's32[1]{0}', space=sflag, size = 0x4, scoped, tag = 'scoped memory for tpu_custom_call.1']
    #allocation5 [shape = 'u8[512]{0}', space=vmem, size = 0x400, scoped, tag = 'input window, operand 1, single buffered']
    #allocation6 [shape = 's32[1]{0}', space=sflag, size = 0x4, scoped, tag = 'scoped memory for tpu_custom_call.1']
    #allocation7 [shape = 'u8[1024]{0}', space=vmem, size = 0x400, scoped, tag = 'output window, operand 0, single buffered']
    %8 = vsyncpa [#allocation3], 0
    %9 = vsyncpa [#allocation6], 0
    %10 = vsyncpa [#allocation4], 0
    // Predicated region
    $region2: #{tpu_custom_call.1} parent=1 // pred_check
      _
    $region3: #{tpu_custom_call.1} parent=1 // pred_check_branch
      %12 = sbr.rel (0) target = $region5
    $region4: #{tpu_custom_call.1} parent=1 // pred_region
      %14 = vsyncadd [#allocation3], 0
      %s16 = sshll.u32 %s0, 4
      %s17 = int_to_ptr.hbm [resolvable:$true] %s16
      %s18 = sshll.u32 [#allocation2], 4
      %s19 = int_to_ptr.vmem [resolvable:$true] %s18
      %21 = dma.hbm_to_vmem [thread:$0]  %s17, 32, %s19, [#allocation3]
    $region5: #{tpu_custom_call.1} parent=1 // pred_fallthru
      _
    // Predicated region
    $region6: #{tpu_custom_call.1} parent=1 // pred_check
      _
    $region7: #{tpu_custom_call.1} parent=1 // pred_check_branch
      %23 = sbr.rel (0) target = $region9
    $region8: #{tpu_custom_call.1} parent=1 // pred_region
      %25 = vsyncadd [#allocation6], 0
      %s27 = sshll.u32 %s1, 4
      %s28 = int_to_ptr.hbm [resolvable:$true] %s27
      %s29 = sshll.u32 [#allocation5], 4
      %s30 = int_to_ptr.vmem [resolvable:$true] %s29
      %32 = dma.hbm_to_vmem [thread:$0]  %s28, 16, %s30, [#allocation6]
    $region9: #{tpu_custom_call.1} parent=1 // pred_fallthru
      _
    // Predicated region
    $region10: #{tpu_custom_call.1} parent=1 // pred_check
      _
    $region11: #{tpu_custom_call.1} parent=1 // pred_check_branch
      %34 = sbr.rel (0) target = $region13
    $region12: #{tpu_custom_call.1} parent=1 // pred_region
      _
    $region13: #{tpu_custom_call.1} parent=1 // pred_fallthru
      _
    // Predicated region
    $region14: #{tpu_custom_call.1} parent=1 // pred_check
      _
    $region15: #{tpu_custom_call.1} parent=1 // pred_check_branch
      %36 = sbr.rel (0) target = $region17
    $region16: #{tpu_custom_call.1} parent=1 // pred_region
      %38 = dma.done [#allocation3], 32
    $region17: #{tpu_custom_call.1} parent=1 // pred_fallthru
      _
    // Predicated region
    $region18: #{tpu_custom_call.1} parent=1 // pred_check
      _
    $region19: #{tpu_custom_call.1} parent=1 // pred_check_branch
      %40 = sbr.rel (0) target = $region21
    $region20: #{tpu_custom_call.1} parent=1 // pred_region
      %42 = dma.done [#allocation6], 16
    $region21: #{tpu_custom_call.1} parent=1 // pred_fallthru
      _
    %v43 = vld [vmem:[#allocation2] sm:$0x3]
    %v44 = vld [vmem:[#allocation5] sm:$0x1]
    %v46 = vperm.slane %v44, 0
    %v48 = vmul.f32 %v43, %v46
    %v49 = vld [vmem:[%s2] sm:$0x1]
    %v51 = vperm.slane %v49, 0
    %v53 = vadd.f32 %v48, %v51
    %vm54 = vcmask 58368
    %55 = vst.msk [vmem:[#allocation7] sm:$0x3] %vm54, %v53
    // Predicated region
    $region22: #{tpu_custom_call.1} parent=1 // pred_check
      _
    $region23: #{tpu_custom_call.1} parent=1 // pred_check_branch
      %57 = sbr.rel (0) target = $region25
    $region24: #{tpu_custom_call.1} parent=1 // pred_region
      %59 = vsyncadd [#allocation4], 0
      %s61 = sshll.u32 [#allocation7], 4
      %s62 = int_to_ptr.vmem [resolvable:$true] %s61
      %s63 = sshll.u32 %s3, 4
      %s64 = int_to_ptr.hbm [resolvable:$true] %s63
      %66 = dma.vmem_to_hbm [thread:$0]  %s62, 32, %s64, [#allocation4]
    $region25: #{tpu_custom_call.1} parent=1 // pred_fallthru
      _
    // Predicated region
    $region26: #{tpu_custom_call.1} parent=1 // pred_check
      _
    $region27: #{tpu_custom_call.1} parent=1 // pred_check_branch
      %68 = sbr.rel (0) target = $region29
    $region28: #{tpu_custom_call.1} parent=1 // pred_region
      %70 = dma.done [#allocation4], 32
    $region29: #{tpu_custom_call.1} parent=1 // pred_fallthru
      _
    %71 = vsyncpa [#allocation3], 1
    %72 = vsyncpa [#allocation6], 1
    %73 = vsyncpa [#allocation4], 1

</llo_original>
